<compile_context>
chip_gen: v7x
topology: tpu7x:2x2x1
jax: 0.10.0
libtpu: 0.0.40
codegen_flags: <defaults>
</compile_context>

<pallas_src>
import jax
import jax.numpy as jnp
from jax.experimental import pallas as pl
from jax.experimental.pallas import tpu as pltpu


def _copy_kernel(x_ref, o_ref):
    # Pure vld -> vst stream of the current VMEM tile (identity forward).
    o_ref[...] = x_ref[...]


def _pick_tile_rows(rows: int, max_tile_rows: int) -> int:
    """Largest row-tile <= max_tile_rows that is a multiple of 8 and divides rows."""
    if rows <= max_tile_rows:
        return rows
    for cand in range(min(max_tile_rows, rows), 7, -1):
        if cand % 8 == 0 and rows % cand == 0:
            return cand
    # TODO(synk): pathological row counts (large prime) fall back to one big
    # block; raise vmem_limit_bytes if that ever exceeds the scoped default.
    return rows


def resnet18_forward(x: jax.Array) -> jax.Array:
    """Pallas implementation of ResNet18.forward (empty nn.Sequential == identity)."""
    B, T, C = x.shape
    dtype = x.dtype
    total = B * T * C
    itemsize = jnp.dtype(dtype).itemsize

    if total % 128 == 0:
        # Lane-dense path: last dim exactly 128 lanes -> unmasked full-lane stores.
        rows = total // 128
        x2d = x.reshape(rows, 128)

        # <= ~4 MiB per buffer; with in+out double-buffering that is <= 16 MiB
        # of VMEM, safe on v5e/v6e (128 MiB) and v7x (64 MiB) without raising
        # the scoped VMEM limit.
        max_tile_rows = max(8, (4 * 1024 * 1024) // (128 * itemsize))
        tile_rows = _pick_tile_rows(rows, max_tile_rows)
        num_tiles = rows // tile_rows

        out2d = pl.pallas_call(
            _copy_kernel,
            out_shape=jax.ShapeDtypeStruct((rows, 128), dtype),
            grid=(num_tiles,),
            in_specs=[pl.BlockSpec((tile_rows, 128), lambda i: (i, 0))],
            out_specs=pl.BlockSpec((tile_rows, 128), lambda i: (i, 0)),
            input_output_aliases={0: 0},
            compiler_params=pltpu.CompilerParams(
                dimension_semantics=("parallel",)
            ),
        )(x2d)
        return out2d.reshape(B, T, C)

    # Fallback (element count not a multiple of 128 lanes): single whole-array
    # block in 2-D (B*T, C); block == full array so the (8,128) rule is
    # satisfied by the full-extent exception.
    x2d = x.reshape(B * T, C)
    out2d = pl.pallas_call(
        _copy_kernel,
        out_shape=jax.ShapeDtypeStruct((B * T, C), dtype),
        in_specs=[pl.BlockSpec((B * T, C), lambda: (0, 0))],
        out_specs=pl.BlockSpec((B * T, C), lambda: (0, 0)),
        input_output_aliases={0: 0},
    )(x2d)
    return out2d.reshape(B, T, C)


if __name__ == "__main__":
    key = jax.random.PRNGKey(0)
    # Small shapes consistent with the module's (B, T, C) input convention.
    B, T, C = 2, 8, 32
    x = jax.random.normal(key, (B, T, C), dtype=jnp.float32)

    fwd = jax.jit(resnet18_forward)
    out = fwd(x)
    out = jax.block_until_ready(out)

    # Correctness check against the reference semantics (identity).
    assert out.shape == (B, T, C)
    assert out.dtype == x.dtype
    assert bool(jnp.allclose(out, x)), "identity forward mismatch"

    print("KERNEL_OK")
</pallas_src>

<mosaic_0001>
module attributes {stable_mosaic.version = 11 : i64} {
  func.func @_copy_kernel(%arg0: i32, %arg1: memref<4x128xf32, #tpu.memory_space<vmem>>, %arg2: memref<4x128xf32, #tpu.memory_space<vmem>>) attributes {dimension_semantics = [#tpu.dimension_semantics<parallel>], iteration_bounds = array<i64: 1>, scalar_prefetch = 0 : i64, scratch_operands = 0 : i64, tpu.core_type = #tpu.core_type<tc>, window_params = [{transform_indices = @transform_0, window_bounds = array<i64: 4, 128>}, {transform_indices = @transform_1, window_bounds = array<i64: 4, 128>}]} {
    %c0 = arith.constant 0 : index
    %c0_0 = arith.constant 0 : index
    %0 = vector.load %arg1[%c0, %c0_0] : memref<4x128xf32, #tpu.memory_space<vmem>>, vector<4x128xf32>
    %c0_1 = arith.constant 0 : index
    %c0_2 = arith.constant 0 : index
    %1 = vector.load %arg2[%c0_1, %c0_2] : memref<4x128xf32, #tpu.memory_space<vmem>>, vector<4x128xf32>
    tpu.vector_store %arg2[%c0_1, %c0_2], %0 {strides = array<i32>} : memref<4x128xf32, #tpu.memory_space<vmem>>, vector<4x128xf32>,
    return
  }
  func.func @transform_0(%arg0: i32) -> (i32, i32) {
    %c0_i32 = arith.constant 0 : i32
    %c0_i32_0 = arith.constant 0 : i32
    return %arg0, %c0_i32 : i32, i32
  }
  func.func @transform_1(%arg0: i32) -> (i32, i32) {
    %c0_i32 = arith.constant 0 : i32
    %c0_i32_0 = arith.constant 0 : i32
    return %arg0, %c0_i32 : i32, i32
  }
}

</mosaic_0001>

<llo_original>
// kernel: resnet18_forward.1
$region0: #{resnet18_forward.1}
  #allocation0 [shape = 'u32[]', space=smem, size = 0x4, offset = 0x4, fixed_abs, tag = 'smem constant byte address 0x4 - core index']
  #allocation1 [shape = 'u32[144,128]{1,0:T(1,128)}', space=vmem, size = 0x12000, scoped, tag = 'internal scratch']
  %s0 = inlined_call_operand.vmem [shape: f32[4,128], index: 0, kind: input, shape index: {}, may-alias: {0,1}]
  %s1 = inlined_call_operand.vmem [shape: f32[4,128], index: 1, kind: output, shape index: {}, may-alias: {0,1}]
  %s2 = sld [smem:[#allocation0]]
  $region14: #{resnet18_forward.1} parent=0
    _
  %s4 = ssub.s32 1, %s2
  %s5 = scalar_select 0, %s4, %s2
  // Predicated region
  $region2: #{resnet18_forward.1} parent=0 // pred_check
    _
  $region3: #{resnet18_forward.1} parent=0 // pred_check_branch
    %7 = sbr.rel (0) target = $region5
  $region4: #{resnet18_forward.1} parent=0 // pred_region
    _
  $region5: #{resnet18_forward.1} parent=0 // pred_fallthru
    _
  %v8 = vld [vmem:[%s0] sm:$0xf]
  %9 = vst [vmem:[%s1] sm:$0xf] %v8
  // Predicated region
  $region6: #{resnet18_forward.1} parent=0 // pred_check
    _
  $region7: #{resnet18_forward.1} parent=0 // pred_check_branch
    %11 = sbr.rel (0) target = $region9
  $region8: #{resnet18_forward.1} parent=0 // pred_region
    _
  $region9: #{resnet18_forward.1} parent=0 // pred_fallthru
    _
  // Predicated region
  $region10: #{resnet18_forward.1} parent=0 // pred_check
    _
  $region11: #{resnet18_forward.1} parent=0 // pred_check_branch
    %13 = sbr.rel (0) target = $region13
  $region12: #{resnet18_forward.1} parent=0 // pred_region
    _
  $region13: #{resnet18_forward.1} parent=0 // pred_fallthru
    _

</llo_original>
